<compile_context>
chip_gen: v7x
topology: tpu7x:2x2x1
jax: 0.10.0
libtpu: 0.0.40
codegen_flags: <defaults>
</compile_context>

<pallas_src>
import jax
import jax.numpy as jnp
from jax import lax
from jax.experimental import pallas as pl
from jax.experimental.pallas import tpu as pltpu


def _round_up(v, m):
    return ((v + m - 1) // m) * m


def _make_kernel(emit_attn, n_j):
    def kernel(flags_ref, x_i_ref, x_j_ref, w2t_ref, w3_ref, w4t_ref,
               adj_ref, *rest):
        if emit_attn:
            out_ref, attn_ref, acc_ref, x4_ref = rest
        else:
            out_ref, acc_ref, x4_ref = rest

        j = pl.program_id(0)
        i = pl.program_id(1)

        @pl.when(i == 0)
        def _init():
            acc_ref[...] = jnp.zeros_like(acc_ref)
            # lin4 projection of the j-tile only changes with j: compute once
            # per j and keep it resident in VMEM scratch for the whole i loop.
            x4_ref[...] = jnp.dot(x_j_ref[...], w4t_ref[...],
                                  preferred_element_type=jnp.float32)

        flag = flags_ref[i * n_j + j]        # SMEM scalar: tile has edges?

        if emit_attn:
            @pl.when(flag == 0)
            def _empty_attn():
                attn_ref[...] = jnp.zeros_like(attn_ref)

        @pl.when(flag != 0)
        def _compute():
            x_i = x_i_ref[...]                                  # [TI, Cp]
            # _x3 rows of this i-tile:  x * W_3[0]
            x3_i = x_i * w3_ref[...]                            # [TI, Cp]
            # attn tile = adjacency-counts ⊙ (x3_i @ x4_j^T)
            attn = adj_ref[...] * lax.dot_general(
                x3_i, x4_ref[...], (((1,), (1,)), ((), ())),
                preferred_element_type=jnp.float32)             # [TI, TJ]
            if emit_attn:
                attn_ref[...] = attn.astype(attn_ref.dtype)
            # lin2 rows of this i-tile, consumed immediately:
            # out[j, h] += sum_i attn[i, j] * x2[i, h]   (== attn^T @ x2)
            x2_i = jnp.dot(x_i, w2t_ref[...],
                           preferred_element_type=jnp.float32)  # [TI, Cp]
            acc_ref[...] += lax.dot_general(
                attn, x2_i, (((0,), (0,)), ((), ())),
                preferred_element_type=jnp.float32)             # [TJ, Cp]

        @pl.when(i == pl.num_programs(1) - 1)
        def _finalize():
            out_ref[...] = acc_ref[...].astype(out_ref.dtype)

    return kernel


def transformer_block(x, edge_index, w2, w3, w4, return_attn_matrix=False):
    # TODO(synk): use_softmax=True branch (masked row-softmax) not implemented;
    #             only the default use_softmax=False path is reproduced here.
    N, C = x.shape
    dtype = x.dtype

    # Lane-dense padding: C -> multiple of 128; N -> multiple of the tile size.
    Cp = _round_up(C, 128)
    Np0 = _round_up(N, 128)
    T = Np0 if Np0 <= 512 else 512
    Np = _round_up(N, T)
    n_i = n_j = Np // T

    # Zero-padding keeps the math exact: padded rows/cols of attn and out are 0.
    xp = jnp.zeros((Np, Cp), dtype).at[:N, :C].set(x)
    w2t = jnp.zeros((Cp, Cp), dtype).at[:C, :C].set(w2.T)
    w4t = jnp.zeros((Cp, Cp), dtype).at[:C, :C].set(w4.T)
    w3p = jnp.zeros((1, Cp), dtype).at[:, :C].set(w3)

    # Dense adjacency with edge multiplicities.
    src = edge_index[0].astype(jnp.int32)
    dst = edge_index[1].astype(jnp.int32)
    adj = jnp.zeros((Np, Np), jnp.float32).at[src, dst].add(1.0)

    # Block-sparsity flags (flattened 1-D SMEM array): flags[i*n_j + j] == 1
    # iff adjacency tile (i, j) contains at least one edge.
    flags = jnp.zeros((n_i * n_j,), jnp.int32).at[
        (src // T) * n_j + (dst // T)].set(1)

    def xi_map(j, i, flags_ref):
        keep = flags_ref[i * n_j + j]
        return (keep * i, 0)                 # empty tile -> reuse block 0 DMA

    def xj_map(j, i, flags_ref):
        return (j, 0)

    def const_map(j, i, flags_ref):
        return (0, 0)

    def adj_map(j, i, flags_ref):
        keep = flags_ref[i * n_j + j]
        return (keep * i, keep * j)          # empty tile -> reuse block (0,0)

    def out_map(j, i, flags_ref):
        return (j, 0)

    def attn_map(j, i, flags_ref):
        return (i, j)

    kernel = _make_kernel(return_attn_matrix, n_j)

    if return_attn_matrix:
        out_shape = (jax.ShapeDtypeStruct((Np, Cp), dtype),
                     jax.ShapeDtypeStruct((Np, Np), dtype))
        out_specs = (pl.BlockSpec((T, Cp), out_map),
                     pl.BlockSpec((T, T), attn_map))
    else:
        out_shape = jax.ShapeDtypeStruct((Np, Cp), dtype)
        out_specs = pl.BlockSpec((T, Cp), out_map)

    flops = (4 * Np * Np * Cp                       # attn + output matmuls
             + 2 * Np * Cp * Cp * (n_j + 1))        # per-tile lin2, per-j lin4
    bytes_accessed = 4 * (3 * Np * Cp + 2 * Cp * Cp + Np * Np
                          + (Np * Np if return_attn_matrix else 0))

    outs = pl.pallas_call(
        kernel,
        out_shape=out_shape,
        grid_spec=pltpu.PrefetchScalarGridSpec(
            num_scalar_prefetch=1,
            grid=(n_j, n_i),
            in_specs=[
                pl.BlockSpec((T, Cp), xi_map),      # x rows of the i-tile
                pl.BlockSpec((T, Cp), xj_map),      # x rows of the j-tile
                pl.BlockSpec((Cp, Cp), const_map),  # W2^T
                pl.BlockSpec((1, Cp), const_map),   # W_3
                pl.BlockSpec((Cp, Cp), const_map),  # W4^T
                pl.BlockSpec((T, T), adj_map),      # adjacency counts
            ],
            out_specs=out_specs,
            scratch_shapes=[pltpu.VMEM((T, Cp), jnp.float32),   # accumulator
                            pltpu.VMEM((T, Cp), jnp.float32)],  # x4_j cache
        ),
        compiler_params=pltpu.CompilerParams(
            dimension_semantics=("parallel", "arbitrary"),
            vmem_limit_bytes=32 * 1024 * 1024,
        ),
        cost_estimate=pl.CostEstimate(
            flops=flops, transcendentals=0, bytes_accessed=bytes_accessed),
    )(flags, xp, xp, w2t, w3p, w4t, adj)

    if return_attn_matrix:
        out, attn = outs
        return out[:N, :C], attn[:N, :N]
    return outs[:N, :C]


def reference(x, edge_index, w2, w3, w4):
    # Pure-JAX mirror of the PyTorch forward (use_softmax=False).
    x2 = x @ w2.T
    _x3 = x * w3[0]
    _x4 = x @ w4.T
    x3 = _x3[edge_index[0]]
    x4 = _x4[edge_index[1]]
    aw = jnp.sum(x3 * x4, axis=-1)
    N = x.shape[0]
    attn = jnp.zeros((N, N), x.dtype).at[edge_index[0], edge_index[1]].add(aw)
    return attn.T @ x2, attn


def _run_case(key, N, C, E, src_max=None):
    kx, k2, k3, k4, ks, kd = jax.random.split(key, 6)
    x = jax.random.normal(kx, (N, C), dtype=jnp.float32)
    w2 = jax.random.normal(k2, (C, C), dtype=jnp.float32) * 0.1   # lin2.weight
    w3 = jax.random.normal(k3, (1, C), dtype=jnp.float32)         # W_3
    w4 = jax.random.normal(k4, (C, C), dtype=jnp.float32) * 0.1   # lin4.weight
    src_hi = N if src_max is None else src_max
    src = jax.random.randint(ks, (E,), 0, src_hi, dtype=jnp.int32)
    dst = jax.random.randint(kd, (E,), 0, N, dtype=jnp.int32)
    edge_index = jnp.stack([src, dst], axis=0)

    out, attn = transformer_block(x, edge_index, w2, w3, w4,
                                  return_attn_matrix=True)
    out = jax.block_until_ready(out)
    attn = jax.block_until_ready(attn)
    out_only = jax.block_until_ready(
        transformer_block(x, edge_index, w2, w3, w4, return_attn_matrix=False))

    ref_out, ref_attn = reference(x, edge_index, w2, w3, w4)
    assert jnp.allclose(out, ref_out, atol=5e-3, rtol=5e-3), "output mismatch"
    assert jnp.allclose(attn, ref_attn, atol=5e-3, rtol=5e-3), "attn mismatch"
    assert jnp.allclose(out_only, ref_out, atol=5e-3, rtol=5e-3), \
        "output mismatch (no-attn variant)"


if __name__ == "__main__":
    key = jax.random.PRNGKey(0)
    k1, k2, k3 = jax.random.split(key, 3)
    # Small single-tile case (c_in == c_out required by x @ diag(W_3[0])).
    _run_case(k1, N=8, C=32, E=16)
    # Medium single-tile case (N padded to 384).
    _run_case(k2, N=300, C=32, E=600)
    # Multi-tile case (2x2 grid of 512-tiles) with src restricted to [0, 400):
    # exercises the (parallel, arbitrary) accumulator, the block-sparsity skip
    # path, and the finalize-on-empty-last-block path.
    _run_case(k3, N=700, C=64, E=1500, src_max=400)
    print("KERNEL_OK")
</pallas_src>

<mosaic_0001>
module attributes {stable_mosaic.version = 11 : i64} {
  func.func @kernel(%arg0: i32, %arg1: i32, %arg2: memref<1xi32, #tpu.memory_space<smem>>, %arg3: memref<128x128xf32, #tpu.memory_space<vmem>>, %arg4: memref<128x128xf32, #tpu.memory_space<vmem>>, %arg5: memref<128x128xf32, #tpu.memory_space<vmem>>, %arg6: memref<1x128xf32, #tpu.memory_space<vmem>>, %arg7: memref<128x128xf32, #tpu.memory_space<vmem>>, %arg8: memref<128x128xf32, #tpu.memory_space<vmem>>, %arg9: memref<128x128xf32, #tpu.memory_space<vmem>>, %arg10: memref<128x128xf32, #tpu.memory_space<vmem>>, %arg11: memref<128x128xf32, #tpu.memory_space<vmem>>, %arg12: memref<128x128xf32, #tpu.memory_space<vmem>>) attributes {dimension_semantics = [#tpu.dimension_semantics<parallel>, #tpu.dimension_semantics<arbitrary>], iteration_bounds = array<i64: 1, 1>, scalar_prefetch = 1 : i64, scratch_operands = 2 : i64, tpu.core_type = #tpu.core_type<tc>, window_params = [{transform_indices = @transform_0, window_bounds = array<i64: 128, 128>}, {transform_indices = @transform_1, window_bounds = array<i64: 128, 128>}, {pipeline_mode = #tpu.pipeline_mode<synchronous>, transform_indices = @transform_2, window_bounds = array<i64: 128, 128>}, {pipeline_mode = #tpu.pipeline_mode<synchronous>, transform_indices = @transform_3, window_bounds = array<i64: 1, 128>}, {pipeline_mode = #tpu.pipeline_mode<synchronous>, transform_indices = @transform_4, window_bounds = array<i64: 128, 128>}, {transform_indices = @transform_5, window_bounds = array<i64: 128, 128>}, {transform_indices = @transform_6, window_bounds = array<i64: 128, 128>}, {transform_indices = @transform_7, window_bounds = array<i64: 128, 128>}]} {
    %c0_i32 = arith.constant 0 : i32
    %0 = arith.cmpi eq, %arg1, %c0_i32 : i32
    %1 = arith.extui %0 : i1 to i32
    %c0_i32_0 = arith.constant 0 : i32
    %2 = arith.cmpi ne, %1, %c0_i32_0 : i32
    scf.if %2 {
      %cst = arith.constant 0.000000e+00 : f32
      %16 = vector.broadcast %cst : f32 to vector<128x128xf32>
      %c0 = arith.constant 0 : index
      %c0_7 = arith.constant 0 : index
      %17 = vector.load %arg11[%c0, %c0_7] : memref<128x128xf32, #tpu.memory_space<vmem>>, vector<128x128xf32>
      tpu.vector_store %arg11[%c0, %c0_7], %16 {strides = array<i32>} : memref<128x128xf32, #tpu.memory_space<vmem>>, vector<128x128xf32>,
      %c0_8 = arith.constant 0 : index
      %c0_9 = arith.constant 0 : index
      %18 = vector.load %arg4[%c0_8, %c0_9] : memref<128x128xf32, #tpu.memory_space<vmem>>, vector<128x128xf32>
      %c0_10 = arith.constant 0 : index
      %c0_11 = arith.constant 0 : index
      %19 = vector.load %arg7[%c0_10, %c0_11] : memref<128x128xf32, #tpu.memory_space<vmem>>, vector<128x128xf32>
      %cst_12 = arith.constant dense<0.000000e+00> : vector<128x128xf32>
      %20 = tpu.matmul %18, %19, %cst_12 {dimension_numbers = #tpu.dot_dimension_numbers<[1], [0], [0], [1], [0, 0, 1, 1], [], []>} : vector<128x128xf32>, vector<128x128xf32>, vector<128x128xf32> -> vector<128x128xf32>
      %c0_13 = arith.constant 0 : index
      %c0_14 = arith.constant 0 : index
      %21 = vector.load %arg12[%c0_13, %c0_14] : memref<128x128xf32, #tpu.memory_space<vmem>>, vector<128x128xf32>
      tpu.vector_store %arg12[%c0_13, %c0_14], %20 {strides = array<i32>} : memref<128x128xf32, #tpu.memory_space<vmem>>, vector<128x128xf32>,
    } else {
    }
    %c1_i32 = arith.constant 1 : i32
    %3 = arith.muli %arg1, %c1_i32 : i32
    %4 = arith.addi %3, %arg0 : i32
    %5 = arith.index_cast %4 : i32 to index
    %6 = memref.load %arg2[%5] : memref<1xi32, #tpu.memory_space<smem>>
    %c0_i32_1 = arith.constant 0 : i32
    %7 = arith.cmpi eq, %6, %c0_i32_1 : i32
    %8 = arith.extui %7 : i1 to i32
    %c0_i32_2 = arith.constant 0 : i32
    %9 = arith.cmpi ne, %8, %c0_i32_2 : i32
    scf.if %9 {
      %cst = arith.constant 0.000000e+00 : f32
      %16 = vector.broadcast %cst : f32 to vector<128x128xf32>
      %c0 = arith.constant 0 : index
      %c0_7 = arith.constant 0 : index
      %17 = vector.load %arg10[%c0, %c0_7] : memref<128x128xf32, #tpu.memory_space<vmem>>, vector<128x128xf32>
      tpu.vector_store %arg10[%c0, %c0_7], %16 {strides = array<i32>} : memref<128x128xf32, #tpu.memory_space<vmem>>, vector<128x128xf32>,
    } else {
    }
    %c0_i32_3 = arith.constant 0 : i32
    %10 = arith.cmpi ne, %6, %c0_i32_3 : i32
    %11 = arith.extui %10 : i1 to i32
    %c0_i32_4 = arith.constant 0 : i32
    %12 = arith.cmpi ne, %11, %c0_i32_4 : i32
    scf.if %12 {
      %c0 = arith.constant 0 : index
      %c0_7 = arith.constant 0 : index
      %16 = vector.load %arg3[%c0, %c0_7] : memref<128x128xf32, #tpu.memory_space<vmem>>, vector<128x128xf32>
      %c0_8 = arith.constant 0 : index
      %c0_9 = arith.constant 0 : index
      %17 = vector.load %arg6[%c0_8, %c0_9] : memref<1x128xf32, #tpu.memory_space<vmem>>, vector<1x128xf32>
      %18 = vector.broadcast %17 : vector<1x128xf32> to vector<128x128xf32>
      %19 = arith.mulf %16, %18 : vector<128x128xf32>
      %c0_10 = arith.constant 0 : index
      %c0_11 = arith.constant 0 : index
      %20 = vector.load %arg8[%c0_10, %c0_11] : memref<128x128xf32, #tpu.memory_space<vmem>>, vector<128x128xf32>
      %c0_12 = arith.constant 0 : index
      %c0_13 = arith.constant 0 : index
      %21 = vector.load %arg12[%c0_12, %c0_13] : memref<128x128xf32, #tpu.memory_space<vmem>>, vector<128x128xf32>
      %cst = arith.constant dense<0.000000e+00> : vector<128x128xf32>
      %22 = tpu.matmul %19, %21, %cst {dimension_numbers = #tpu.dot_dimension_numbers<[1], [1], [0], [0], [0, 0, 1, 0], [], []>} : vector<128x128xf32>, vector<128x128xf32>, vector<128x128xf32> -> vector<128x128xf32>
      %23 = arith.mulf %20, %22 : vector<128x128xf32>
      %c0_14 = arith.constant 0 : index
      %c0_15 = arith.constant 0 : index
      %24 = vector.load %arg10[%c0_14, %c0_15] : memref<128x128xf32, #tpu.memory_space<vmem>>, vector<128x128xf32>
      tpu.vector_store %arg10[%c0_14, %c0_15], %23 {strides = array<i32>} : memref<128x128xf32, #tpu.memory_space<vmem>>, vector<128x128xf32>,
      %c0_16 = arith.constant 0 : index
      %c0_17 = arith.constant 0 : index
      %25 = vector.load %arg5[%c0_16, %c0_17] : memref<128x128xf32, #tpu.memory_space<vmem>>, vector<128x128xf32>
      %cst_18 = arith.constant dense<0.000000e+00> : vector<128x128xf32>
      %26 = tpu.matmul %16, %25, %cst_18 {dimension_numbers = #tpu.dot_dimension_numbers<[1], [0], [0], [1], [0, 0, 1, 1], [], []>} : vector<128x128xf32>, vector<128x128xf32>, vector<128x128xf32> -> vector<128x128xf32>
      %c0_19 = arith.constant 0 : index
      %c0_20 = arith.constant 0 : index
      %27 = vector.load %arg11[%c0_19, %c0_20] : memref<128x128xf32, #tpu.memory_space<vmem>>, vector<128x128xf32>
      %cst_21 = arith.constant dense<0.000000e+00> : vector<128x128xf32>
      %28 = tpu.matmul %23, %26, %cst_21 {dimension_numbers = #tpu.dot_dimension_numbers<[0], [0], [1], [1], [0, 1, 1, 1], [], []>} : vector<128x128xf32>, vector<128x128xf32>, vector<128x128xf32> -> vector<128x128xf32>
      %29 = arith.addf %27, %28 : vector<128x128xf32>
      %c0_22 = arith.constant 0 : index
      %c0_23 = arith.constant 0 : index
      %30 = vector.load %arg11[%c0_22, %c0_23] : memref<128x128xf32, #tpu.memory_space<vmem>>, vector<128x128xf32>
      tpu.vector_store %arg11[%c0_22, %c0_23], %29 {strides = array<i32>} : memref<128x128xf32, #tpu.memory_space<vmem>>, vector<128x128xf32>,
    } else {
    }
    %c0_i32_5 = arith.constant 0 : i32
    %13 = arith.cmpi eq, %arg1, %c0_i32_5 : i32
    %14 = arith.extui %13 : i1 to i32
    %c0_i32_6 = arith.constant 0 : i32
    %15 = arith.cmpi ne, %14, %c0_i32_6 : i32
    scf.if %15 {
      %c0 = arith.constant 0 : index
      %c0_7 = arith.constant 0 : index
      %16 = vector.load %arg11[%c0, %c0_7] : memref<128x128xf32, #tpu.memory_space<vmem>>, vector<128x128xf32>
      %c0_8 = arith.constant 0 : index
      %c0_9 = arith.constant 0 : index
      %17 = vector.load %arg9[%c0_8, %c0_9] : memref<128x128xf32, #tpu.memory_space<vmem>>, vector<128x128xf32>
      tpu.vector_store %arg9[%c0_8, %c0_9], %16 {strides = array<i32>} : memref<128x128xf32, #tpu.memory_space<vmem>>, vector<128x128xf32>,
    } else {
    }
    return
  }
  func.func @transform_0(%arg0: i32, %arg1: i32, %arg2: memref<1xi32, #tpu.memory_space<smem>>) -> (i32, i32) {
    %c1_i32 = arith.constant 1 : i32
    %0 = arith.muli %arg1, %c1_i32 : i32
    %1 = arith.addi %0, %arg0 : i32
    %2 = arith.index_cast %1 : i32 to index
    %3 = memref.load %arg2[%2] : memref<1xi32, #tpu.memory_space<smem>>
    %4 = arith.muli %3, %arg1 : i32
    %c0_i32 = arith.constant 0 : i32
    %c0_i32_0 = arith.constant 0 : i32
    return %4, %c0_i32 : i32, i32
  }
  func.func @transform_1(%arg0: i32, %arg1: i32, %arg2: memref<1xi32, #tpu.memory_space<smem>>) -> (i32, i32) {
    %c0_i32 = arith.constant 0 : i32
    %c0_i32_0 = arith.constant 0 : i32
    return %arg0, %c0_i32 : i32, i32
  }
  func.func @transform_2(%arg0: i32, %arg1: i32, %arg2: memref<1xi32, #tpu.memory_space<smem>>) -> (i32, i32) {
    %c0_i32 = arith.constant 0 : i32
    %c0_i32_0 = arith.constant 0 : i32
    %c0_i32_1 = arith.constant 0 : i32
    return %c0_i32, %c0_i32_0 : i32, i32
  }
  func.func @transform_3(%arg0: i32, %arg1: i32, %arg2: memref<1xi32, #tpu.memory_space<smem>>) -> (i32, i32) {
    %c0_i32 = arith.constant 0 : i32
    %c0_i32_0 = arith.constant 0 : i32
    %c0_i32_1 = arith.constant 0 : i32
    return %c0_i32, %c0_i32_0 : i32, i32
  }
  func.func @transform_4(%arg0: i32, %arg1: i32, %arg2: memref<1xi32, #tpu.memory_space<smem>>) -> (i32, i32) {
    %c0_i32 = arith.constant 0 : i32
    %c0_i32_0 = arith.constant 0 : i32
    %c0_i32_1 = arith.constant 0 : i32
    return %c0_i32, %c0_i32_0 : i32, i32
  }
  func.func @transform_5(%arg0: i32, %arg1: i32, %arg2: memref<1xi32, #tpu.memory_space<smem>>) -> (i32, i32) {
    %c1_i32 = arith.constant 1 : i32
    %0 = arith.muli %arg1, %c1_i32 : i32
    %1 = arith.addi %0, %arg0 : i32
    %2 = arith.index_cast %1 : i32 to index
    %3 = memref.load %arg2[%2] : memref<1xi32, #tpu.memory_space<smem>>
    %4 = arith.muli %3, %arg1 : i32
    %5 = arith.muli %3, %arg0 : i32
    %c0_i32 = arith.constant 0 : i32
    return %4, %5 : i32, i32
  }
  func.func @transform_6(%arg0: i32, %arg1: i32, %arg2: memref<1xi32, #tpu.memory_space<smem>>) -> (i32, i32) {
    %c0_i32 = arith.constant 0 : i32
    %c0_i32_0 = arith.constant 0 : i32
    return %arg0, %c0_i32 : i32, i32
  }
  func.func @transform_7(%arg0: i32, %arg1: i32, %arg2: memref<1xi32, #tpu.memory_space<smem>>) -> (i32, i32) {
    %c0_i32 = arith.constant 0 : i32
    return %arg1, %arg0 : i32, i32
  }
}

</mosaic_0001>

<llo_original>
// kernel: tpu_custom_call.1
$region0: #{tpu_custom_call.1}
  #allocation0 [shape = 'u32[]', space=smem, size = 0x4, offset = 0x4, fixed_abs, tag = 'smem constant byte address 0x4 - core index']
  #allocation1 [shape = 'u32[144,128]{1,0:T(1,128)}', space=vmem, size = 0x12000, scoped, tag = 'internal scratch']
  #allocation2 [shape = 'f32[128,128]{1,0:T(8,128)}', space=vmem, size = 0x10000, scoped, tag = 'scratch operand']
  #allocation3 [shape = 'f32[128,128]{1,0:T(8,128)}', space=vmem, size = 0x10000, scoped, tag = 'scratch operand']
  #allocation4 [shape = 's32[1]{0}', space=sflag, size = 0x4, scoped, tag = 'scoped memory for tpu_custom_call.1']
  #allocation5 [shape = 's32[1]{0:T(128)S(6)}', space=smem, size = 0x200, scoped, tag = 'prefetched SMEM operand 0']
  %s0 = inlined_call_operand.<no memory space> [shape: s32[1], index: 0, kind: input, shape index: {}]
  %s1 = inlined_call_operand.hbm [shape: f32[128,128], index: 1, kind: input, shape index: {}]
  %s2 = inlined_call_operand.hbm [shape: f32[128,128], index: 2, kind: input, shape index: {}]
  %s3 = inlined_call_operand.hbm [shape: f32[128,128], index: 3, kind: input, shape index: {}]
  %s4 = inlined_call_operand.vmem [shape: f32[1,128], index: 4, kind: input, shape index: {}]
  %s5 = inlined_call_operand.hbm [shape: f32[128,128], index: 5, kind: input, shape index: {}]
  %s6 = inlined_call_operand.hbm [shape: f32[128,128], index: 6, kind: input, shape index: {}]
  %s7 = inlined_call_operand.hbm [shape: f32[128,128], index: 7, kind: output, shape index: {0}]
  %s8 = inlined_call_operand.hbm [shape: f32[128,128], index: 8, kind: output, shape index: {1}]
  %9 = xla_tuple %s7, %s8
  %s10 = sld [smem:[#allocation0]]
  $region78: #{tpu_custom_call.1} parent=0
    _
  %s12 = ssub.s32 1, %s10
  %s13 = scalar_select 0, %s12, %s10
  %14 = sst [smem:[#allocation5]] %s0
  $region1: #{tpu_custom_call.1} parent=0
    #allocation6 [shape = 'u8[65536]{0}', space=vmem, size = 0x10000, scoped, tag = 'input window, operand 1, single buffered']
    #allocation7 [shape = 's32[1]{0}', space=sflag, size = 0x4, scoped, tag = 'scoped memory for tpu_custom_call.1']
    #allocation8 [shape = 's32[1]{0}', space=sflag, size = 0x4, scoped, tag = 'scoped memory for tpu_custom_call.1']
    #allocation9 [shape = 'u8[65536]{0}', space=vmem, size = 0x10000, scoped, tag = 'input window, operand 2, single buffered']
    #allocation10 [shape = 's32[1]{0}', space=sflag, size = 0x4, scoped, tag = 'scoped memory for tpu_custom_call.1']
    #allocation11 [shape = 'u8[65536]{0}', space=vmem, size = 0x10000, scoped, tag = 'input window, operand 3, single buffered']
    #allocation12 [shape = 'u8[65536]{0}', space=vmem, size = 0x10000, scoped, tag = 'input window, operand 5, single buffered']
    #allocation13 [shape = 's32[1]{0}', space=sflag, size = 0x4, scoped, tag = 'scoped memory for tpu_custom_call.1']
    #allocation14 [shape = 'u8[65536]{0}', space=vmem, size = 0x10000, scoped, tag = 'input window, operand 6, single buffered']
    #allocation15 [shape = 'u8[65536]{0}', space=vmem, size = 0x10000, scoped, tag = 'output window, operand 0, single buffered']
    #allocation16 [shape = 'u8[65536]{0}', space=vmem, size = 0x10000, scoped, tag = 'output window, operand 1, single buffered']
    #allocation17 [shape = 's32[1]{0}', space=sflag, size = 0x4, scoped, tag = 'scoped memory for tpu_custom_call.1']
    %15 = vsyncpa [#allocation7], 0
    %16 = vsyncpa [#allocation10], 0
    %17 = vsyncpa [#allocation13], 0
    %18 = vsyncpa [#allocation8], 0
    %19 = vsyncpa [#allocation17], 0
    // Predicated region
    $region2: #{tpu_custom_call.1} parent=1 // pred_check
      _
    $region3: #{tpu_custom_call.1} parent=1 // pred_check_branch
      %21 = sbr.rel (0) target = $region5
    $region4: #{tpu_custom_call.1} parent=1 // pred_region
      %s22 = sadd.s32 0, 0
      %s23 = sld [smem:[#allocation5 + %s22]]
      %s24 = smul.u32 %s23, 0
      %s25 = smul.u32 16, %s24
      %s27 = ssub.s32 2048, 2048
      %28 = vsyncadd [#allocation7], %s27
      %s29 = smul.addr %s25, 128
      %s30 = scalar_lea.hbm %s1, %s29
      %s31 = sshll.u32 [#allocation6], 4
      %s32 = int_to_ptr.vmem [resolvable:$true] %s31
      %37 = dma.hbm_to_vmem [thread:$0]  %s30, 2048, %s32, [#allocation7], 128, 128, 8
    $region5: #{tpu_custom_call.1} parent=1 // pred_fallthru
      _
    // Predicated region
    $region6: #{tpu_custom_call.1} parent=1 // pred_check
      _
    $region7: #{tpu_custom_call.1} parent=1 // pred_check_branch
      %39 = sbr.rel (0) target = $region9
    $region8: #{tpu_custom_call.1} parent=1 // pred_region
      %s41 = ssub.s32 2048, 2048
      %42 = vsyncadd [#allocation10], %s41
      %s43 = sshll.u32 [#allocation9], 4
      %s44 = int_to_ptr.vmem [resolvable:$true] %s43
      %49 = dma.hbm_to_vmem [thread:$0]  %s2, 2048, %s44, [#allocation10], 128, 128, 8
    $region9: #{tpu_custom_call.1} parent=1 // pred_fallthru
      _
    // Predicated region
    $region10: #{tpu_custom_call.1} parent=1 // pred_check
      _
    $region11: #{tpu_custom_call.1} parent=1 // pred_check_branch
      %51 = sbr.rel (0) target = $region13
    $region12: #{tpu_custom_call.1} parent=1 // pred_region
      %s53 = ssub.s32 2048, 2048
      %54 = vsyncadd [#allocation10], %s53
      %s55 = sshll.u32 [#allocation11], 4
      %s56 = int_to_ptr.vmem [resolvable:$true] %s55
      %61 = dma.hbm_to_vmem [thread:$0]  %s3, 2048, %s56, [#allocation10], 128, 128, 8
    $region13: #{tpu_custom_call.1} parent=1 // pred_fallthru
      _
    // Predicated region
    $region14: #{tpu_custom_call.1} parent=1 // pred_check
      _
    $region15: #{tpu_custom_call.1} parent=1 // pred_check_branch
      %63 = sbr.rel (0) target = $region17
    $region16: #{tpu_custom_call.1} parent=1 // pred_region
      _
    $region17: #{tpu_custom_call.1} parent=1 // pred_fallthru
      _
    // Predicated region
    $region18: #{tpu_custom_call.1} parent=1 // pred_check
      _
    $region19: #{tpu_custom_call.1} parent=1 // pred_check_branch
      %65 = sbr.rel (0) target = $region21
    $region20: #{tpu_custom_call.1} parent=1 // pred_region
      %s67 = ssub.s32 2048, 2048
      %68 = vsyncadd [#allocation13], %s67
      %s69 = sshll.u32 [#allocation12], 4
      %s70 = int_to_ptr.vmem [resolvable:$true] %s69
      %75 = dma.hbm_to_vmem [thread:$0]  %s5, 2048, %s70, [#allocation13], 128, 128, 8
    $region21: #{tpu_custom_call.1} parent=1 // pred_fallthru
      _
    // Predicated region
    $region22: #{tpu_custom_call.1} parent=1 // pred_check
      _
    $region23: #{tpu_custom_call.1} parent=1 // pred_check_branch
      %77 = sbr.rel (0) target = $region25
    $region24: #{tpu_custom_call.1} parent=1 // pred_region
      %s78 = sadd.s32 0, 0
      %s79 = sld [smem:[#allocation5 + %s78]]
      %s80 = smul.u32 %s79, 0
      %s81 = smul.u32 %s79, 0
      %s82 = smul.u32 16, %s80
      %s84 = ssub.s32 2048, 2048
      %85 = vsyncadd [#allocation13], %s84
      %s86 = sadd.s32 %s81, %s82
      %s87 = smul.addr %s86, 128
      %s88 = scalar_lea.hbm %s6, %s87
      %s89 = sshll.u32 [#allocation14], 4
      %s90 = int_to_ptr.vmem [resolvable:$true] %s89
      %95 = dma.hbm_to_vmem [thread:$0]  %s88, 2048, %s90, [#allocation13], 128, 128, 8
    $region25: #{tpu_custom_call.1} parent=1 // pred_fallthru
      _
    // Predicated region
    $region26: #{tpu_custom_call.1} parent=1 // pred_check
      _
    $region27: #{tpu_custom_call.1} parent=1 // pred_check_branch
      %97 = sbr.rel (0) target = $region29
    $region28: #{tpu_custom_call.1} parent=1 // pred_region
      %98 = dma.done [#allocation7], 2048
    $region29: #{tpu_custom_call.1} parent=1 // pred_fallthru
      _
    // Predicated region
    $region30: #{tpu_custom_call.1} parent=1 // pred_check
      _
    $region31: #{tpu_custom_call.1} parent=1 // pred_check_branch
      %100 = sbr.rel (0) target = $region33
    $region32: #{tpu_custom_call.1} parent=1 // pred_region
      %101 = dma.done [#allocation10], 2048
    $region33: #{tpu_custom_call.1} parent=1 // pred_fallthru
      _
    // Predicated region
    $region34: #{tpu_custom_call.1} parent=1 // pred_check
      _
    $region35: #{tpu_custom_call.1} parent=1 // pred_check_branch
      %103 = sbr.rel (0) target = $region37
    $region36: #{tpu_custom_call.1} parent=1 // pred_region
      %104 = dma.done [#allocation10], 2048
    $region37: #{tpu_custom_call.1} parent=1 // pred_fallthru
      _
    // Predicated region
    $region38: #{tpu_custom_call.1} parent=1 // pred_check
      _
    $region39: #{tpu_custom_call.1} parent=1 // pred_check_branch
      %106 = sbr.rel (0) target = $region41
    $region40: #{tpu_custom_call.1} parent=1 // pred_region
      %107 = dma.done [#allocation13], 2048
    $region41: #{tpu_custom_call.1} parent=1 // pred_fallthru
      _
    // Predicated region
    $region42: #{tpu_custom_call.1} parent=1 // pred_check
      _
    $region43: #{tpu_custom_call.1} parent=1 // pred_check_branch
      %109 = sbr.rel (0) target = $region45
    $region44: #{tpu_custom_call.1} parent=1 // pred_region
      %110 = dma.done [#allocation13], 2048
    $region45: #{tpu_custom_call.1} parent=1 // pred_fallthru
      _
    %s111 = sadd.s32 0, 0
    %s112 = sld [smem:[#allocation5 + %s111]]
    %s113 = smul.u32 %s112, 0
    %s114 = smul.u32 16, %s113
    %s115 = sadd.s32 0, 0
    %s116 = sld [smem:[#allocation5 + %s115]]
    %s117 = smul.u32 %s116, 0
    %s118 = smul.u32 %s116, 0
    %s119 = smul.u32 16, %s117
    %p120 = scmp.eq.s32.totalorder 0, 0
    // Predicated region
    $region46: #{tpu_custom_call.1} parent=1 // pred_check
      %p121 = pneg %p120
    $region47: #{tpu_custom_call.1} parent=1 // pred_check_branch
      %123 = sbr.rel (%p121) target = $region49
    $region48: #{tpu_custom_call.1} parent=1 // pred_region
      %124 = vst [vmem:[#allocation2] sm:$0xff] 0.0
      %125 = vst [vmem:[#allocation2 + $0x8] sm:$0xff] 0.0
      %126 = vst [vmem:[#allocation2 + $0x10] sm:$0xff] 0.0
      %127 = vst [vmem:[#allocation2 + $0x18] sm:$0xff] 0.0
      %128 = vst [vmem:[#allocation2 + $0x20] sm:$0xff] 0.0
      %129 = vst [vmem:[#allocation2 + $0x28] sm:$0xff] 0.0
      %130 = vst [vmem:[#allocation2 + $0x30] sm:$0xff] 0.0
      %131 = vst [vmem:[#allocation2 + $0x38] sm:$0xff] 0.0
      %132 = vst [vmem:[#allocation2 + $0x40] sm:$0xff] 0.0
      %133 = vst [vmem:[#allocation2 + $0x48] sm:$0xff] 0.0
      %134 = vst [vmem:[#allocation2 + $0x50] sm:$0xff] 0.0
      %135 = vst [vmem:[#allocation2 + $0x58] sm:$0xff] 0.0
      %136 = vst [vmem:[#allocation2 + $0x60] sm:$0xff] 0.0
      %137 = vst [vmem:[#allocation2 + $0x68] sm:$0xff] 0.0
      %138 = vst [vmem:[#allocation2 + $0x70] sm:$0xff] 0.0
      %139 = vst [vmem:[#allocation2 + $0x78] sm:$0xff] 0.0
      %v140 = vld [vmem:[#allocation9] sm:$0xff]
      %v141 = vld [vmem:[#allocation9 + $0x8] sm:$0xff]
      %v142 = vld [vmem:[#allocation9 + $0x10] sm:$0xff]
      %v143 = vld [vmem:[#allocation9 + $0x18] sm:$0xff]
      %v144 = vld [vmem:[#allocation9 + $0x20] sm:$0xff]
      %v145 = vld [vmem:[#allocation9 + $0x28] sm:$0xff]
      %v146 = vld [vmem:[#allocation9 + $0x30] sm:$0xff]
      %v147 = vld [vmem:[#allocation9 + $0x38] sm:$0xff]
      %v148 = vld [vmem:[#allocation9 + $0x40] sm:$0xff]
      %v149 = vld [vmem:[#allocation9 + $0x48] sm:$0xff]
      %v150 = vld [vmem:[#allocation9 + $0x50] sm:$0xff]
      %v151 = vld [vmem:[#allocation9 + $0x58] sm:$0xff]
      %v152 = vld [vmem:[#allocation9 + $0x60] sm:$0xff]
      %v153 = vld [vmem:[#allocation9 + $0x68] sm:$0xff]
      %v154 = vld [vmem:[#allocation9 + $0x70] sm:$0xff]
      %v155 = vld [vmem:[#allocation9 + $0x78] sm:$0xff]
      %v156 = vld [vmem:[#allocation12] sm:$0xff]
      %v157 = vld [vmem:[#allocation12 + $0x8] sm:$0xff]
      %v158 = vld [vmem:[#allocation12 + $0x10] sm:$0xff]
      %v159 = vld [vmem:[#allocation12 + $0x18] sm:$0xff]
      %v160 = vld [vmem:[#allocation12 + $0x20] sm:$0xff]
      %v161 = vld [vmem:[#allocation12 + $0x28] sm:$0xff]
      %v162 = vld [vmem:[#allocation12 + $0x30] sm:$0xff]
      %v163 = vld [vmem:[#allocation12 + $0x38] sm:$0xff]
      %v164 = vld [vmem:[#allocation12 + $0x40] sm:$0xff]
      %v165 = vld [vmem:[#allocation12 + $0x48] sm:$0xff]
      %v166 = vld [vmem:[#allocation12 + $0x50] sm:$0xff]
      %v167 = vld [vmem:[#allocation12 + $0x58] sm:$0xff]
      %v168 = vld [vmem:[#allocation12 + $0x60] sm:$0xff]
      %v169 = vld [vmem:[#allocation12 + $0x68] sm:$0xff]
      %v170 = vld [vmem:[#allocation12 + $0x70] sm:$0xff]
      %v171 = vld [vmem:[#allocation12 + $0x78] sm:$0xff]
      %172 = vmatprep.subr.mxu0 0.0
      %173 = vmatpush1.msra.mxu0 %v156
      %174 = vmatprep.subr.mxu0 0.0
      %175 = vmatpush1.msra.mxu0 %v157
      %176 = vmatprep.subr.mxu0 0.0
      %177 = vmatpush1.msra.mxu0 %v158
      %178 = vmatprep.subr.mxu0 0.0
      %179 = vmatpush1.msra.mxu0 %v159
      %180 = vmatprep.subr.mxu0 0.0
      %181 = vmatpush1.msra.mxu0 %v160
      %182 = vmatprep.subr.mxu0 0.0
      %183 = vmatpush1.msra.mxu0 %v161
      %184 = vmatprep.subr.mxu0 0.0
      %185 = vmatpush1.msra.mxu0 %v162
      %186 = vmatprep.subr.mxu0 0.0
      %187 = vmatpush1.msra.mxu0 %v163
      %188 = vmatprep.subr.mxu0 0.0
      %189 = vmatpush1.msra.mxu0 %v164
      %190 = vmatprep.subr.mxu0 0.0
      %191 = vmatpush1.msra.mxu0 %v165
      %192 = vmatprep.subr.mxu0 0.0
      %193 = vmatpush1.msra.mxu0 %v166
      %194 = vmatprep.subr.mxu0 0.0
      %195 = vmatpush1.msra.mxu0 %v167
      %196 = vmatprep.subr.mxu0 0.0
      %197 = vmatpush1.msra.mxu0 %v168
      %198 = vmatprep.subr.mxu0 0.0
      %199 = vmatpush1.msra.mxu0 %v169
      %200 = vmatprep.subr.mxu0 0.0
      %201 = vmatpush1.msra.mxu0 %v170
      %202 = vmatprep.subr.mxu0 0.0
      %203 = vmatpush1.msra.mxu0 %v171
      %204 = vmatprep.subr.mxu0 0.0
      %205 = vmatpush1.msra.mxu0 0.0
      %206 = vmatprep.subr.mxu0 0.0
      %207 = vmatpush1.msra.mxu0 0.0
      %208 = vmatprep.subr.mxu0 0.0
      %209 = vmatpush1.msra.mxu0 0.0
      %210 = vmatprep.subr.mxu0 0.0
      %211 = vmatpush1.msra.mxu0 0.0
      %212 = vmatprep.subr.mxu0 0.0
      %213 = vmatpush1.msra.mxu0 0.0
      %214 = vmatprep.subr.mxu0 0.0
      %215 = vmatpush1.msra.mxu0 0.0
      %216 = vmatprep.subr.mxu0 0.0
      %217 = vmatpush1.msra.mxu0 0.0
      %218 = vmatprep.subr.mxu0 0.0
      %219 = vmatpush1.msra.mxu0 0.0
      %220 = vmatprep.subr.mxu0 0.0
      %221 = vmatpush1.msra.mxu0 0.0
      %222 = vmatprep.subr.mxu0 0.0
      %223 = vmatpush1.msra.mxu0 0.0
      %224 = vmatprep.subr.mxu0 0.0
      %225 = vmatpush1.msra.mxu0 0.0
      %226 = vmatprep.subr.mxu0 0.0
      %227 = vmatpush1.msra.mxu0 0.0
      %228 = vmatprep.subr.mxu0 0.0
      %229 = vmatpush1.msra.mxu0 0.0
      %230 = vmatprep.subr.mxu0 0.0
      %231 = vmatpush1.msra.mxu0 0.0
      %232 = vmatprep.subr.mxu0 0.0
      %233 = vmatpush1.msra.mxu0 0.0
      %234 = vmatprep.subr.mxu0 0.0
      %235 = vmatpush1.msra.mxu0 0.0
      %236 = vmatprep.mubr.f32.mxu0 0.0
      %237 = vmatmul.mubr.f32.gmra.mrb[0].mxu0 %v140
      %v238 = vpop.f32.mrb[0].mxu0
      %v239 = vadd.f32 0.0, %v238
      %v240 = vpop.f32.mrb[0].mxu0
      %241 = vmatprep.mubr.f32.mxu0 0.0
      %242 = vmatmul.mubr.f32.gmra.mrb[0].mxu0 %v141
      %v243 = vpop.f32.mrb[0].mxu0
      %v244 = vadd.f32 0.0, %v243
      %v245 = vpop.f32.mrb[0].mxu0
      %246 = vmatprep.mubr.f32.mxu0 0.0
      %247 = vmatmul.mubr.f32.gmra.mrb[0].mxu0 %v142
      %v248 = vpop.f32.mrb[0].mxu0
      %v249 = vadd.f32 0.0, %v248
      %v250 = vpop.f32.mrb[0].mxu0
      %251 = vmatprep.mubr.f32.mxu0 0.0
      %252 = vmatmul.mubr.f32.gmra.mrb[0].mxu0 %v143
      %v253 = vpop.f32.mrb[0].mxu0
      %v254 = vadd.f32 0.0, %v253
      %v255 = vpop.f32.mrb[0].mxu0
      %256 = vmatprep.mubr.f32.mxu0 0.0
      %257 = vmatmul.mubr.f32.gmra.mrb[0].mxu0 %v144
      %v258 = vpop.f32.mrb[0].mxu0
      %v259 = vadd.f32 0.0, %v258
      %v260 = vpop.f32.mrb[0].mxu0
      %261 = vmatprep.mubr.f32.mxu0 0.0
      %262 = vmatmul.mubr.f32.gmra.mrb[0].mxu0 %v145
      %v263 = vpop.f32.mrb[0].mxu0
      %v264 = vadd.f32 0.0, %v263
      %v265 = vpop.f32.mrb[0].mxu0
      %266 = vmatprep.mubr.f32.mxu0 0.0
      %267 = vmatmul.mubr.f32.gmra.mrb[0].mxu0 %v146
      %v268 = vpop.f32.mrb[0].mxu0
      %v269 = vadd.f32 0.0, %v268
      %v270 = vpop.f32.mrb[0].mxu0
      %271 = vmatprep.mubr.f32.mxu0 0.0
      %272 = vmatmul.mubr.f32.gmra.mrb[0].mxu0 %v147
      %v273 = vpop.f32.mrb[0].mxu0
      %v274 = vadd.f32 0.0, %v273
      %v275 = vpop.f32.mrb[0].mxu0
      %276 = vmatprep.mubr.f32.mxu0 0.0
      %277 = vmatmul.mubr.f32.gmra.mrb[0].mxu0 %v148
      %v278 = vpop.f32.mrb[0].mxu0
      %v279 = vadd.f32 0.0, %v278
      %v280 = vpop.f32.mrb[0].mxu0
      %281 = vmatprep.mubr.f32.mxu0 0.0
      %282 = vmatmul.mubr.f32.gmra.mrb[0].mxu0 %v149
      %v283 = vpop.f32.mrb[0].mxu0
      %v284 = vadd.f32 0.0, %v283
      %v285 = vpop.f32.mrb[0].mxu0
      %286 = vmatprep.mubr.f32.mxu0 0.0
      %287 = vmatmul.mubr.f32.gmra.mrb[0].mxu0 %v150
      %v288 = vpop.f32.mrb[0].mxu0
      %v289 = vadd.f32 0.0, %v288
      %v290 = vpop.f32.mrb[0].mxu0
      %291 = vmatprep.mubr.f32.mxu0 0.0
      %292 = vmatmul.mubr.f32.gmra.mrb[0].mxu0 %v151
      %v293 = vpop.f32.mrb[0].mxu0
      %v294 = vadd.f32 0.0, %v293
      %v295 = vpop.f32.mrb[0].mxu0
      %296 = vmatprep.mubr.f32.mxu0 0.0
      %297 = vmatmul.mubr.f32.gmra.mrb[0].mxu0 %v152
      %v298 = vpop.f32.mrb[0].mxu0
      %v299 = vadd.f32 0.0, %v298
      %v300 = vpop.f32.mrb[0].mxu0
      %301 = vmatprep.mubr.f32.mxu0 0.0
      %302 = vmatmul.mubr.f32.gmra.mrb[0].mxu0 %v153
      %v303 = vpop.f32.mrb[0].mxu0
      %v304 = vadd.f32 0.0, %v303
      %v305 = vpop.f32.mrb[0].mxu0
      %306 = vmatprep.mubr.f32.mxu0 0.0
      %307 = vmatmul.mubr.f32.gmra.mrb[0].mxu0 %v154
      %v308 = vpop.f32.mrb[0].mxu0
      %v309 = vadd.f32 0.0, %v308
      %v310 = vpop.f32.mrb[0].mxu0
      %311 = vmatprep.mubr.f32.mxu0 0.0
      %312 = vmatmul.mubr.f32.gmra.mrb[0].mxu0 %v155
      %v313 = vpop.f32.mrb[0].mxu0
      %v314 = vadd.f32 0.0, %v313
      %v315 = vpop.f32.mrb[0].mxu0
      %316 = vdwg.mxu0
      %317 = vst [vmem:[#allocation3] sm:$0xff] %v239
      %318 = vst [vmem:[#allocation3 + $0x8] sm:$0xff] %v244
      %319 = vst [vmem:[#allocation3 + $0x10] sm:$0xff] %v249
      %320 = vst [vmem:[#allocation3 + $0x18] sm:$0xff] %v254
      %321 = vst [vmem:[#allocation3 + $0x20] sm:$0xff] %v259
      %322 = vst [vmem:[#allocation3 + $0x28] sm:$0xff] %v264
      %323 = vst [vmem:[#allocation3 + $0x30] sm:$0xff] %v269
      %324 = vst [vmem:[#allocation3 + $0x38] sm:$0xff] %v274
      %325 = vst [vmem:[#allocation3 + $0x40] sm:$0xff] %v279
      %326 = vst [vmem:[#allocation3 + $0x48] sm:$0xff] %v284
      %327 = vst [vmem:[#allocation3 + $0x50] sm:$0xff] %v289
      %328 = vst [vmem:[#allocation3 + $0x58] sm:$0xff] %v294
      %329 = vst [vmem:[#allocation3 + $0x60] sm:$0xff] %v299
      %330 = vst [vmem:[#allocation3 + $0x68] sm:$0xff] %v304
      %331 = vst [vmem:[#allocation3 + $0x70] sm:$0xff] %v309
      %332 = vst [vmem:[#allocation3 + $0x78] sm:$0xff] %v314
    $region49: #{tpu_custom_call.1} parent=1 // pred_fallthru
      _
    %s333 = sadd.s32 0, 0
    %s334 = sld [smem:[#allocation5 + %s333]]
    %p335 = scmp.eq.s32.totalorder %s334, 0
    // Predicated region
    $region50: #{tpu_custom_call.1} parent=1 // pred_check
      %p336 = pneg %p335
    $region51: #{tpu_custom_call.1} parent=1 // pred_check_branch
      %338 = sbr.rel (%p336) target = $region53
    $region52: #{tpu_custom_call.1} parent=1 // pred_region
      %339 = vst [vmem:[#allocation16] sm:$0xff] 0.0
      %340 = vst [vmem:[#allocation16 + $0x8] sm:$0xff] 0.0
      %341 = vst [vmem:[#allocation16 + $0x10] sm:$0xff] 0.0
      %342 = vst [vmem:[#allocation16 + $0x18] sm:$0xff] 0.0
      %343 = vst [vmem:[#allocation16 + $0x20] sm:$0xff] 0.0
      %344 = vst [vmem:[#allocation16 + $0x28] sm:$0xff] 0.0
      %345 = vst [vmem:[#allocation16 + $0x30] sm:$0xff] 0.0
      %346 = vst [vmem:[#allocation16 + $0x38] sm:$0xff] 0.0
      %347 = vst [vmem:[#allocation16 + $0x40] sm:$0xff] 0.0
      %348 = vst [vmem:[#allocation16 + $0x48] sm:$0xff] 0.0
      %349 = vst [vmem:[#allocation16 + $0x50] sm:$0xff] 0.0
      %350 = vst [vmem:[#allocation16 + $0x58] sm:$0xff] 0.0
      %351 = vst [vmem:[#allocation16 + $0x60] sm:$0xff] 0.0
      %352 = vst [vmem:[#allocation16 + $0x68] sm:$0xff] 0.0
      %353 = vst [vmem:[#allocation16 + $0x70] sm:$0xff] 0.0
      %354 = vst [vmem:[#allocation16 + $0x78] sm:$0xff] 0.0
    $region53: #{tpu_custom_call.1} parent=1 // pred_fallthru
      _
    %p355 = scmp.ne.s32.totalorder %s334, 0
    // Predicated region
    $region54: #{tpu_custom_call.1} parent=1 // pred_check
      %p356 = pneg %p355
    $region55: #{tpu_custom_call.1} parent=1 // pred_check_branch
      %358 = sbr.rel (%p356) target = $region57
    $region56: #{tpu_custom_call.1} parent=1 // pred_region
      %v359 = vld [vmem:[#allocation6] sm:$0xff]
      %v360 = vld [vmem:[#allocation6 + $0x8] sm:$0xff]
      %v361 = vld [vmem:[#allocation6 + $0x10] sm:$0xff]
      %v362 = vld [vmem:[#allocation6 + $0x18] sm:$0xff]
      %v363 = vld [vmem:[#allocation6 + $0x20] sm:$0xff]
      %v364 = vld [vmem:[#allocation6 + $0x28] sm:$0xff]
      %v365 = vld [vmem:[#allocation6 + $0x30] sm:$0xff]
      %v366 = vld [vmem:[#allocation6 + $0x38] sm:$0xff]
      %v367 = vld [vmem:[#allocation6 + $0x40] sm:$0xff]
      %v368 = vld [vmem:[#allocation6 + $0x48] sm:$0xff]
      %v369 = vld [vmem:[#allocation6 + $0x50] sm:$0xff]
      %v370 = vld [vmem:[#allocation6 + $0x58] sm:$0xff]
      %v371 = vld [vmem:[#allocation6 + $0x60] sm:$0xff]
      %v372 = vld [vmem:[#allocation6 + $0x68] sm:$0xff]
      %v373 = vld [vmem:[#allocation6 + $0x70] sm:$0xff]
      %v374 = vld [vmem:[#allocation6 + $0x78] sm:$0xff]
      %v375 = vld [vmem:[%s4] sm:$0x1]
      %v377 = vlaneseq
      %v378 = vshrl.u32 %v377, 7
      %v379 = vsub.s32 0, %v378
      %v380 = vrot.slane %v375, %v379
      %v382 = vmul.f32 %v359, %v380
      %v383 = vmul.f32 %v360, %v380
      %v384 = vmul.f32 %v361, %v380
      %v385 = vmul.f32 %v362, %v380
      %v386 = vmul.f32 %v363, %v380
      %v387 = vmul.f32 %v364, %v380
      %v388 = vmul.f32 %v365, %v380
      %v389 = vmul.f32 %v366, %v380
      %v390 = vmul.f32 %v367, %v380
      %v391 = vmul.f32 %v368, %v380
      %v392 = vmul.f32 %v369, %v380
      %v393 = vmul.f32 %v370, %v380
      %v394 = vmul.f32 %v371, %v380
      %v395 = vmul.f32 %v372, %v380
      %v396 = vmul.f32 %v373, %v380
      %v397 = vmul.f32 %v374, %v380
      %v398 = vld [vmem:[#allocation14] sm:$0xff]
      %v399 = vld [vmem:[#allocation14 + $0x8] sm:$0xff]
      %v400 = vld [vmem:[#allocation14 + $0x10] sm:$0xff]
      %v401 = vld [vmem:[#allocation14 + $0x18] sm:$0xff]
      %v402 = vld [vmem:[#allocation14 + $0x20] sm:$0xff]
      %v403 = vld [vmem:[#allocation14 + $0x28] sm:$0xff]
      %v404 = vld [vmem:[#allocation14 + $0x30] sm:$0xff]
      %v405 = vld [vmem:[#allocation14 + $0x38] sm:$0xff]
      %v406 = vld [vmem:[#allocation14 + $0x40] sm:$0xff]
      %v407 = vld [vmem:[#allocation14 + $0x48] sm:$0xff]
      %v408 = vld [vmem:[#allocation14 + $0x50] sm:$0xff]
      %v409 = vld [vmem:[#allocation14 + $0x58] sm:$0xff]
      %v410 = vld [vmem:[#allocation14 + $0x60] sm:$0xff]
      %v411 = vld [vmem:[#allocation14 + $0x68] sm:$0xff]
      %v412 = vld [vmem:[#allocation14 + $0x70] sm:$0xff]
      %v413 = vld [vmem:[#allocation14 + $0x78] sm:$0xff]
      %v414 = vld [vmem:[#allocation3] sm:$0xff]
      %v415 = vld [vmem:[#allocation3 + $0x8] sm:$0xff]
      %v416 = vld [vmem:[#allocation3 + $0x10] sm:$0xff]
      %v417 = vld [vmem:[#allocation3 + $0x18] sm:$0xff]
      %v418 = vld [vmem:[#allocation3 + $0x20] sm:$0xff]
      %v419 = vld [vmem:[#allocation3 + $0x28] sm:$0xff]
      %v420 = vld [vmem:[#allocation3 + $0x30] sm:$0xff]
      %v421 = vld [vmem:[#allocation3 + $0x38] sm:$0xff]
      %v422 = vld [vmem:[#allocation3 + $0x40] sm:$0xff]
      %v423 = vld [vmem:[#allocation3 + $0x48] sm:$0xff]
      %v424 = vld [vmem:[#allocation3 + $0x50] sm:$0xff]
      %v425 = vld [vmem:[#allocation3 + $0x58] sm:$0xff]
      %v426 = vld [vmem:[#allocation3 + $0x60] sm:$0xff]
      %v427 = vld [vmem:[#allocation3 + $0x68] sm:$0xff]
      %v428 = vld [vmem:[#allocation3 + $0x70] sm:$0xff]
      %v429 = vld [vmem:[#allocation3 + $0x78] sm:$0xff]
      %430 = vmatprep.subr.mxu0 0.0
      %431 = vmatpush1.xpose.msra.mxu0 %v414
      %432 = vmatprep.subr.mxu0 0.0
      %433 = vmatpush1.xpose.msra.mxu0 %v415
      %434 = vmatprep.subr.mxu0 0.0
      %435 = vmatpush1.xpose.msra.mxu0 %v416
      %436 = vmatprep.subr.mxu0 0.0
      %437 = vmatpush1.xpose.msra.mxu0 %v417
      %438 = vmatprep.subr.mxu0 0.0
      %439 = vmatpush1.xpose.msra.mxu0 %v418
      %440 = vmatprep.subr.mxu0 0.0
      %441 = vmatpush1.xpose.msra.mxu0 %v419
      %442 = vmatprep.subr.mxu0 0.0
      %443 = vmatpush1.xpose.msra.mxu0 %v420
      %444 = vmatprep.subr.mxu0 0.0
      %445 = vmatpush1.xpose.msra.mxu0 %v421
      %446 = vmatprep.subr.mxu0 0.0
      %447 = vmatpush1.xpose.msra.mxu0 %v422
      %448 = vmatprep.subr.mxu0 0.0
      %449 = vmatpush1.xpose.msra.mxu0 %v423
      %450 = vmatprep.subr.mxu0 0.0
      %451 = vmatpush1.xpose.msra.mxu0 %v424
      %452 = vmatprep.subr.mxu0 0.0
      %453 = vmatpush1.xpose.msra.mxu0 %v425
      %454 = vmatprep.subr.mxu0 0.0
      %455 = vmatpush1.xpose.msra.mxu0 %v426
      %456 = vmatprep.subr.mxu0 0.0
      %457 = vmatpush1.xpose.msra.mxu0 %v427
      %458 = vmatprep.subr.mxu0 0.0
      %459 = vmatpush1.xpose.msra.mxu0 %v428
      %460 = vmatprep.subr.mxu0 0.0
      %461 = vmatpush1.xpose.msra.mxu0 %v429
      %462 = vmatprep.subr.mxu0 0.0
      %463 = vmatpush1.xpose.msra.mxu0 0.0
      %464 = vmatprep.subr.mxu0 0.0
      %465 = vmatpush1.xpose.msra.mxu0 0.0
      %466 = vmatprep.subr.mxu0 0.0
      %467 = vmatpush1.xpose.msra.mxu0 0.0
      %468 = vmatprep.subr.mxu0 0.0
      %469 = vmatpush1.xpose.msra.mxu0 0.0
      %470 = vmatprep.subr.mxu0 0.0
      %471 = vmatpush1.xpose.msra.mxu0 0.0
      %472 = vmatprep.subr.mxu0 0.0
      %473 = vmatpush1.xpose.msra.mxu0 0.0
      %474 = vmatprep.subr.mxu0 0.0
      %475 = vmatpush1.xpose.msra.mxu0 0.0
      %476 = vmatprep.subr.mxu0 0.0
      %477 = vmatpush1.xpose.msra.mxu0 0.0
      %478 = vmatprep.subr.mxu0 0.0
      %479 = vmatpush1.xpose.msra.mxu0 0.0
      %480 = vmatprep.subr.mxu0 0.0
      %481 = vmatpush1.xpose.msra.mxu0 0.0
      %482 = vmatprep.subr.mxu0 0.0
      %483 = vmatpush1.xpose.msra.mxu0 0.0
      %484 = vmatprep.subr.mxu0 0.0
      %485 = vmatpush1.xpose.msra.mxu0 0.0
      %486 = vmatprep.subr.mxu0 0.0
      %487 = vmatpush1.xpose.msra.mxu0 0.0
      %488 = vmatprep.subr.mxu0 0.0
      %489 = vmatpush1.xpose.msra.mxu0 0.0
      %490 = vmatprep.subr.mxu0 0.0
      %491 = vmatpush1.xpose.msra.mxu0 0.0
      %492 = vmatprep.subr.mxu0 0.0
      %493 = vmatpush1.xpose.msra.mxu0 0.0
      %494 = vmatprep.mubr.f32.mxu0 0.0
      %495 = vmatmul.mubr.f32.gmra.mrb[0].mxu0 %v382
      %v496 = vpop.f32.mrb[0].mxu0
      %v497 = vadd.f32 0.0, %v496
      %v498 = vpop.f32.mrb[0].mxu0
      %499 = vmatprep.mubr.f32.mxu0 0.0
      %500 = vmatmul.mubr.f32.gmra.mrb[0].mxu0 %v383
      %v501 = vpop.f32.mrb[0].mxu0
      %v502 = vadd.f32 0.0, %v501
      %v503 = vpop.f32.mrb[0].mxu0
      %504 = vmatprep.mubr.f32.mxu0 0.0
      %505 = vmatmul.mubr.f32.gmra.mrb[0].mxu0 %v384
      %v506 = vpop.f32.mrb[0].mxu0
      %v507 = vadd.f32 0.0, %v506
      %v508 = vpop.f32.mrb[0].mxu0
      %509 = vmatprep.mubr.f32.mxu0 0.0
      %510 = vmatmul.mubr.f32.gmra.mrb[0].mxu0 %v385
      %v511 = vpop.f32.mrb[0].mxu0
      %v512 = vadd.f32 0.0, %v511
      %v513 = vpop.f32.mrb[0].mxu0
      %514 = vmatprep.mubr.f32.mxu0 0.0
      %515 = vmatmul.mubr.f32.gmra.mrb[0].mxu0 %v386
      %v516 = vpop.f32.mrb[0].mxu0
      %v517 = vadd.f32 0.0, %v516
      %v518 = vpop.f32.mrb[0].mxu0
      %519 = vmatprep.mubr.f32.mxu0 0.0
      %520 = vmatmul.mubr.f32.gmra.mrb[0].mxu0 %v387
      %v521 = vpop.f32.mrb[0].mxu0
      %v522 = vadd.f32 0.0, %v521
      %v523 = vpop.f32.mrb[0].mxu0
      %524 = vmatprep.mubr.f32.mxu0 0.0
      %525 = vmatmul.mubr.f32.gmra.mrb[0].mxu0 %v388
      %v526 = vpop.f32.mrb[0].mxu0
      %v527 = vadd.f32 0.0, %v526
      %v528 = vpop.f32.mrb[0].mxu0
      %529 = vmatprep.mubr.f32.mxu0 0.0
      %530 = vmatmul.mubr.f32.gmra.mrb[0].mxu0 %v389
      %v531 = vpop.f32.mrb[0].mxu0
      %v532 = vadd.f32 0.0, %v531
      %v533 = vpop.f32.mrb[0].mxu0
      %534 = vmatprep.mubr.f32.mxu0 0.0
      %535 = vmatmul.mubr.f32.gmra.mrb[0].mxu0 %v390
      %v536 = vpop.f32.mrb[0].mxu0
      %v537 = vadd.f32 0.0, %v536
      %v538 = vpop.f32.mrb[0].mxu0
      %539 = vmatprep.mubr.f32.mxu0 0.0
      %540 = vmatmul.mubr.f32.gmra.mrb[0].mxu0 %v391
      %v541 = vpop.f32.mrb[0].mxu0
      %v542 = vadd.f32 0.0, %v541
      %v543 = vpop.f32.mrb[0].mxu0
      %544 = vmatprep.mubr.f32.mxu0 0.0
      %545 = vmatmul.mubr.f32.gmra.mrb[0].mxu0 %v392
      %v546 = vpop.f32.mrb[0].mxu0
      %v547 = vadd.f32 0.0, %v546
      %v548 = vpop.f32.mrb[0].mxu0
      %549 = vmatprep.mubr.f32.mxu0 0.0
      %550 = vmatmul.mubr.f32.gmra.mrb[0].mxu0 %v393
      %v551 = vpop.f32.mrb[0].mxu0
      %v552 = vadd.f32 0.0, %v551
      %v553 = vpop.f32.mrb[0].mxu0
      %554 = vmatprep.mubr.f32.mxu0 0.0
      %555 = vmatmul.mubr.f32.gmra.mrb[0].mxu0 %v394
      %v556 = vpop.f32.mrb[0].mxu0
      %v557 = vadd.f32 0.0, %v556
      %v558 = vpop.f32.mrb[0].mxu0
      %559 = vmatprep.mubr.f32.mxu0 0.0
      %560 = vmatmul.mubr.f32.gmra.mrb[0].mxu0 %v395
      %v561 = vpop.f32.mrb[0].mxu0
      %v562 = vadd.f32 0.0, %v561
      %v563 = vpop.f32.mrb[0].mxu0
      %564 = vmatprep.mubr.f32.mxu0 0.0
      %565 = vmatmul.mubr.f32.gmra.mrb[0].mxu0 %v396
      %v566 = vpop.f32.mrb[0].mxu0
      %v567 = vadd.f32 0.0, %v566
      %v568 = vpop.f32.mrb[0].mxu0
      %569 = vmatprep.mubr.f32.mxu0 0.0
      %570 = vmatmul.mubr.f32.gmra.mrb[0].mxu0 %v397
      %v571 = vpop.f32.mrb[0].mxu0
      %v572 = vadd.f32 0.0, %v571
      %v573 = vpop.f32.mrb[0].mxu0
      %574 = vdwg.mxu0
      %v575 = vmul.f32 %v398, %v497
      %v576 = vmul.f32 %v399, %v502
      %v577 = vmul.f32 %v400, %v507
      %v578 = vmul.f32 %v401, %v512
      %v579 = vmul.f32 %v402, %v517
      %v580 = vmul.f32 %v403, %v522
      %v581 = vmul.f32 %v404, %v527
      %v582 = vmul.f32 %v405, %v532
      %v583 = vmul.f32 %v406, %v537
      %v584 = vmul.f32 %v407, %v542
      %v585 = vmul.f32 %v408, %v547
      %v586 = vmul.f32 %v409, %v552
      %v587 = vmul.f32 %v410, %v557
      %v588 = vmul.f32 %v411, %v562
      %v589 = vmul.f32 %v412, %v567
      %v590 = vmul.f32 %v413, %v572
      %591 = vst [vmem:[#allocation16] sm:$0xff] %v575
      %592 = vst [vmem:[#allocation16 + $0x8] sm:$0xff] %v576
      %593 = vst [vmem:[#allocation16 + $0x10] sm:$0xff] %v577
      %594 = vst [vmem:[#allocation16 + $0x18] sm:$0xff] %v578
      %595 = vst [vmem:[#allocation16 + $0x20] sm:$0xff] %v579
      %596 = vst [vmem:[#allocation16 + $0x28] sm:$0xff] %v580
      %597 = vst [vmem:[#allocation16 + $0x30] sm:$0xff] %v581
      %598 = vst [vmem:[#allocation16 + $0x38] sm:$0xff] %v582
      %599 = vst [vmem:[#allocation16 + $0x40] sm:$0xff] %v583
      %600 = vst [vmem:[#allocation16 + $0x48] sm:$0xff] %v584
      %601 = vst [vmem:[#allocation16 + $0x50] sm:$0xff] %v585
      %602 = vst [vmem:[#allocation16 + $0x58] sm:$0xff] %v586
      %603 = vst [vmem:[#allocation16 + $0x60] sm:$0xff] %v587
      %604 = vst [vmem:[#allocation16 + $0x68] sm:$0xff] %v588
      %605 = vst [vmem:[#allocation16 + $0x70] sm:$0xff] %v589
      %606 = vst [vmem:[#allocation16 + $0x78] sm:$0xff] %v590
      %v607 = vld [vmem:[#allocation11] sm:$0xff]
      %v608 = vld [vmem:[#allocation11 + $0x8] sm:$0xff]
      %v609 = vld [vmem:[#allocation11 + $0x10] sm:$0xff]
      %v610 = vld [vmem:[#allocation11 + $0x18] sm:$0xff]
      %v611 = vld [vmem:[#allocation11 + $0x20] sm:$0xff]
      %v612 = vld [vmem:[#allocation11 + $0x28] sm:$0xff]
      %v613 = vld [vmem:[#allocation11 + $0x30] sm:$0xff]
      %v614 = vld [vmem:[#allocation11 + $0x38] sm:$0xff]
      %v615 = vld [vmem:[#allocation11 + $0x40] sm:$0xff]
      %v616 = vld [vmem:[#allocation11 + $0x48] sm:$0xff]
      %v617 = vld [vmem:[#allocation11 + $0x50] sm:$0xff]
      %v618 = vld [vmem:[#allocation11 + $0x58] sm:$0xff]
      %v619 = vld [vmem:[#allocation11 + $0x60] sm:$0xff]
      %v620 = vld [vmem:[#allocation11 + $0x68] sm:$0xff]
      %v621 = vld [vmem:[#allocation11 + $0x70] sm:$0xff]
      %v622 = vld [vmem:[#allocation11 + $0x78] sm:$0xff]
      %623 = vmatprep.subr.mxu0 0.0
      %624 = vmatpush1.msra.mxu0 %v607
      %625 = vmatprep.subr.mxu0 0.0
      %626 = vmatpush1.msra.mxu0 %v608
      %627 = vmatprep.subr.mxu0 0.0
      %628 = vmatpush1.msra.mxu0 %v609
      %629 = vmatprep.subr.mxu0 0.0
      %630 = vmatpush1.msra.mxu0 %v610
      %631 = vmatprep.subr.mxu0 0.0
      %632 = vmatpush1.msra.mxu0 %v611
      %633 = vmatprep.subr.mxu0 0.0
      %634 = vmatpush1.msra.mxu0 %v612
      %635 = vmatprep.subr.mxu0 0.0
      %636 = vmatpush1.msra.mxu0 %v613
      %637 = vmatprep.subr.mxu0 0.0
      %638 = vmatpush1.msra.mxu0 %v614
      %639 = vmatprep.subr.mxu0 0.0
      %640 = vmatpush1.msra.mxu0 %v615
      %641 = vmatprep.subr.mxu0 0.0
      %642 = vmatpush1.msra.mxu0 %v616
      %643 = vmatprep.subr.mxu0 0.0
      %644 = vmatpush1.msra.mxu0 %v617
      %645 = vmatprep.subr.mxu0 0.0
      %646 = vmatpush1.msra.mxu0 %v618
      %647 = vmatprep.subr.mxu0 0.0
      %648 = vmatpush1.msra.mxu0 %v619
      %649 = vmatprep.subr.mxu0 0.0
      %650 = vmatpush1.msra.mxu0 %v620
      %651 = vmatprep.subr.mxu0 0.0
      %652 = vmatpush1.msra.mxu0 %v621
      %653 = vmatprep.subr.mxu0 0.0
      %654 = vmatpush1.msra.mxu0 %v622
      %655 = vmatprep.subr.mxu0 0.0
      %656 = vmatpush1.msra.mxu0 0.0
      %657 = vmatprep.subr.mxu0 0.0
      %658 = vmatpush1.msra.mxu0 0.0
      %659 = vmatprep.subr.mxu0 0.0
      %660 = vmatpush1.msra.mxu0 0.0
      %661 = vmatprep.subr.mxu0 0.0
      %662 = vmatpush1.msra.mxu0 0.0
      %663 = vmatprep.subr.mxu0 0.0
      %664 = vmatpush1.msra.mxu0 0.0
      %665 = vmatprep.subr.mxu0 0.0
      %666 = vmatpush1.msra.mxu0 0.0
      %667 = vmatprep.subr.mxu0 0.0
      %668 = vmatpush1.msra.mxu0 0.0
      %669 = vmatprep.subr.mxu0 0.0
      %670 = vmatpush1.msra.mxu0 0.0
      %671 = vmatprep.subr.mxu0 0.0
      %672 = vmatpush1.msra.mxu0 0.0
      %673 = vmatprep.subr.mxu0 0.0
      %674 = vmatpush1.msra.mxu0 0.0
      %675 = vmatprep.subr.mxu0 0.0
      %676 = vmatpush1.msra.mxu0 0.0
      %677 = vmatprep.subr.mxu0 0.0
      %678 = vmatpush1.msra.mxu0 0.0
      %679 = vmatprep.subr.mxu0 0.0
      %680 = vmatpush1.msra.mxu0 0.0
      %681 = vmatprep.subr.mxu0 0.0
      %682 = vmatpush1.msra.mxu0 0.0
      %683 = vmatprep.subr.mxu0 0.0
      %684 = vmatpush1.msra.mxu0 0.0
      %685 = vmatprep.subr.mxu0 0.0
      %686 = vmatpush1.msra.mxu0 0.0
      %687 = vmatprep.mubr.f32.mxu0 0.0
      %688 = vmatmul.mubr.f32.gmra.mrb[0].mxu0 %v359
      %v689 = vpop.f32.mrb[0].mxu0
      %v690 = vadd.f32 0.0, %v689
      %v691 = vpop.f32.mrb[0].mxu0
      %692 = vmatprep.mubr.f32.mxu0 0.0
      %693 = vmatmul.mubr.f32.gmra.mrb[0].mxu0 %v360
      %v694 = vpop.f32.mrb[0].mxu0
      %v695 = vadd.f32 0.0, %v694
      %v696 = vpop.f32.mrb[0].mxu0
      %697 = vmatprep.mubr.f32.mxu0 0.0
      %698 = vmatmul.mubr.f32.gmra.mrb[0].mxu0 %v361
      %v699 = vpop.f32.mrb[0].mxu0
      %v700 = vadd.f32 0.0, %v699
      %v701 = vpop.f32.mrb[0].mxu0
      %702 = vmatprep.mubr.f32.mxu0 0.0
      %703 = vmatmul.mubr.f32.gmra.mrb[0].mxu0 %v362
      %v704 = vpop.f32.mrb[0].mxu0
      %v705 = vadd.f32 0.0, %v704
      %v706 = vpop.f32.mrb[0].mxu0
      %707 = vmatprep.mubr.f32.mxu0 0.0
      %708 = vmatmul.mubr.f32.gmra.mrb[0].mxu0 %v363
      %v709 = vpop.f32.mrb[0].mxu0
      %v710 = vadd.f32 0.0, %v709
      %v711 = vpop.f32.mrb[0].mxu0
      %712 = vmatprep.mubr.f32.mxu0 0.0
      %713 = vmatmul.mubr.f32.gmra.mrb[0].mxu0 %v364
      %v714 = vpop.f32.mrb[0].mxu0
      %v715 = vadd.f32 0.0, %v714
      %v716 = vpop.f32.mrb[0].mxu0
      %717 = vmatprep.mubr.f32.mxu0 0.0
      %718 = vmatmul.mubr.f32.gmra.mrb[0].mxu0 %v365
      %v719 = vpop.f32.mrb[0].mxu0
      %v720 = vadd.f32 0.0, %v719
      %v721 = vpop.f32.mrb[0].mxu0
      %722 = vmatprep.mubr.f32.mxu0 0.0
      %723 = vmatmul.mubr.f32.gmra.mrb[0].mxu0 %v366
      %v724 = vpop.f32.mrb[0].mxu0
      %v725 = vadd.f32 0.0, %v724
      %v726 = vpop.f32.mrb[0].mxu0
      %727 = vmatprep.mubr.f32.mxu0 0.0
      %728 = vmatmul.mubr.f32.gmra.mrb[0].mxu0 %v367
      %v729 = vpop.f32.mrb[0].mxu0
      %v730 = vadd.f32 0.0, %v729
      %v731 = vpop.f32.mrb[0].mxu0
      %732 = vmatprep.mubr.f32.mxu0 0.0
      %733 = vmatmul.mubr.f32.gmra.mrb[0].mxu0 %v368
      %v734 = vpop.f32.mrb[0].mxu0
      %v735 = vadd.f32 0.0, %v734
      %v736 = vpop.f32.mrb[0].mxu0
      %737 = vmatprep.mubr.f32.mxu0 0.0
      %738 = vmatmul.mubr.f32.gmra.mrb[0].mxu0 %v369
      %v739 = vpop.f32.mrb[0].mxu0
      %v740 = vadd.f32 0.0, %v739
      %v741 = vpop.f32.mrb[0].mxu0
      %742 = vmatprep.mubr.f32.mxu0 0.0
      %743 = vmatmul.mubr.f32.gmra.mrb[0].mxu0 %v370
      %v744 = vpop.f32.mrb[0].mxu0
      %v745 = vadd.f32 0.0, %v744
      %v746 = vpop.f32.mrb[0].mxu0
      %747 = vmatprep.mubr.f32.mxu0 0.0
      %748 = vmatmul.mubr.f32.gmra.mrb[0].mxu0 %v371
      %v749 = vpop.f32.mrb[0].mxu0
      %v750 = vadd.f32 0.0, %v749
      %v751 = vpop.f32.mrb[0].mxu0
      %752 = vmatprep.mubr.f32.mxu0 0.0
      %753 = vmatmul.mubr.f32.gmra.mrb[0].mxu0 %v372
      %v754 = vpop.f32.mrb[0].mxu0
      %v755 = vadd.f32 0.0, %v754
      %v756 = vpop.f32.mrb[0].mxu0
      %757 = vmatprep.mubr.f32.mxu0 0.0
      %758 = vmatmul.mubr.f32.gmra.mrb[0].mxu0 %v373
      %v759 = vpop.f32.mrb[0].mxu0
      %v760 = vadd.f32 0.0, %v759
      %v761 = vpop.f32.mrb[0].mxu0
      %762 = vmatprep.mubr.f32.mxu0 0.0
      %763 = vmatmul.mubr.f32.gmra.mrb[0].mxu0 %v374
      %v764 = vpop.f32.mrb[0].mxu0
      %v765 = vadd.f32 0.0, %v764
      %v766 = vpop.f32.mrb[0].mxu0
      %767 = vdwg.mxu0
      %v768 = vld [vmem:[#allocation2] sm:$0xff]
      %v769 = vld [vmem:[#allocation2 + $0x8] sm:$0xff]
      %v770 = vld [vmem:[#allocation2 + $0x10] sm:$0xff]
      %v771 = vld [vmem:[#allocation2 + $0x18] sm:$0xff]
      %v772 = vld [vmem:[#allocation2 + $0x20] sm:$0xff]
      %v773 = vld [vmem:[#allocation2 + $0x28] sm:$0xff]
      %v774 = vld [vmem:[#allocation2 + $0x30] sm:$0xff]
      %v775 = vld [vmem:[#allocation2 + $0x38] sm:$0xff]
      %v776 = vld [vmem:[#allocation2 + $0x40] sm:$0xff]
      %v777 = vld [vmem:[#allocation2 + $0x48] sm:$0xff]
      %v778 = vld [vmem:[#allocation2 + $0x50] sm:$0xff]
      %v779 = vld [vmem:[#allocation2 + $0x58] sm:$0xff]
      %v780 = vld [vmem:[#allocation2 + $0x60] sm:$0xff]
      %v781 = vld [vmem:[#allocation2 + $0x68] sm:$0xff]
      %v782 = vld [vmem:[#allocation2 + $0x70] sm:$0xff]
      %v783 = vld [vmem:[#allocation2 + $0x78] sm:$0xff]
      %784 = vxpose.xlu0.b32.start [1/16] %v575, 128
      %785 = vxpose.xlu0.b32.cont [2/16] %v576, 128
      %786 = vxpose.xlu0.b32.cont [3/16] %v577, 128
      %787 = vxpose.xlu0.b32.cont [4/16] %v578, 128
      %788 = vxpose.xlu0.b32.cont [5/16] %v579, 128
      %789 = vxpose.xlu0.b32.cont [6/16] %v580, 128
      %790 = vxpose.xlu0.b32.cont [7/16] %v581, 128
      %791 = vxpose.xlu0.b32.cont [8/16] %v582, 128
      %792 = vxpose.xlu0.b32.cont [9/16] %v583, 128
      %793 = vxpose.xlu0.b32.cont [10/16] %v584, 128
      %794 = vxpose.xlu0.b32.cont [11/16] %v585, 128
      %795 = vxpose.xlu0.b32.cont [12/16] %v586, 128
      %796 = vxpose.xlu0.b32.cont [13/16] %v587, 128
      %797 = vxpose.xlu0.b32.cont [14/16] %v588, 128
      %798 = vxpose.xlu0.b32.cont [15/16] %v589, 128
      %799 = vxpose.xlu0.b32.end [16/16] %v590, 128
      %v800 = vpop.trf.xlu0
      %v801 = vpop.trf.xlu0
      %v802 = vpop.trf.xlu0
      %v803 = vpop.trf.xlu0
      %v804 = vpop.trf.xlu0
      %v805 = vpop.trf.xlu0
      %v806 = vpop.trf.xlu0
      %v807 = vpop.trf.xlu0
      %v808 = vpop.trf.xlu0
      %v809 = vpop.trf.xlu0
      %v810 = vpop.trf.xlu0
      %v811 = vpop.trf.xlu0
      %v812 = vpop.trf.xlu0
      %v813 = vpop.trf.xlu0
      %v814 = vpop.trf.xlu0
      %v815 = vpop.trf.xlu0
      %816 = vmatprep.subr.mxu0 0.0
      %817 = vmatpush1.msra.mxu0 %v690
      %818 = vmatprep.subr.mxu0 0.0
      %819 = vmatpush1.msra.mxu0 %v695
      %820 = vmatprep.subr.mxu0 0.0
      %821 = vmatpush1.msra.mxu0 %v700
      %822 = vmatprep.subr.mxu0 0.0
      %823 = vmatpush1.msra.mxu0 %v705
      %824 = vmatprep.subr.mxu0 0.0
      %825 = vmatpush1.msra.mxu0 %v710
      %826 = vmatprep.subr.mxu0 0.0
      %827 = vmatpush1.msra.mxu0 %v715
      %828 = vmatprep.subr.mxu0 0.0
      %829 = vmatpush1.msra.mxu0 %v720
      %830 = vmatprep.subr.mxu0 0.0
      %831 = vmatpush1.msra.mxu0 %v725
      %832 = vmatprep.subr.mxu0 0.0
      %833 = vmatpush1.msra.mxu0 %v730
      %834 = vmatprep.subr.mxu0 0.0
      %835 = vmatpush1.msra.mxu0 %v735
      %836 = vmatprep.subr.mxu0 0.0
      %837 = vmatpush1.msra.mxu0 %v740
      %838 = vmatprep.subr.mxu0 0.0
      %839 = vmatpush1.msra.mxu0 %v745
      %840 = vmatprep.subr.mxu0 0.0
      %841 = vmatpush1.msra.mxu0 %v750
      %842 = vmatprep.subr.mxu0 0.0
      %843 = vmatpush1.msra.mxu0 %v755
      %844 = vmatprep.subr.mxu0 0.0
      %845 = vmatpush1.msra.mxu0 %v760
      %846 = vmatprep.subr.mxu0 0.0
      %847 = vmatpush1.msra.mxu0 %v765
      %848 = vmatprep.subr.mxu0 0.0
      %849 = vmatpush1.msra.mxu0 0.0
      %850 = vmatprep.subr.mxu0 0.0
      %851 = vmatpush1.msra.mxu0 0.0
      %852 = vmatprep.subr.mxu0 0.0
      %853 = vmatpush1.msra.mxu0 0.0
      %854 = vmatprep.subr.mxu0 0.0
      %855 = vmatpush1.msra.mxu0 0.0
      %856 = vmatprep.subr.mxu0 0.0
      %857 = vmatpush1.msra.mxu0 0.0
      %858 = vmatprep.subr.mxu0 0.0
      %859 = vmatpush1.msra.mxu0 0.0
      %860 = vmatprep.subr.mxu0 0.0
      %861 = vmatpush1.msra.mxu0 0.0
      %862 = vmatprep.subr.mxu0 0.0
      %863 = vmatpush1.msra.mxu0 0.0
      %864 = vmatprep.subr.mxu0 0.0
      %865 = vmatpush1.msra.mxu0 0.0
      %866 = vmatprep.subr.mxu0 0.0
      %867 = vmatpush1.msra.mxu0 0.0
      %868 = vmatprep.subr.mxu0 0.0
      %869 = vmatpush1.msra.mxu0 0.0
      %870 = vmatprep.subr.mxu0 0.0
      %871 = vmatpush1.msra.mxu0 0.0
      %872 = vmatprep.subr.mxu0 0.0
      %873 = vmatpush1.msra.mxu0 0.0
      %874 = vmatprep.subr.mxu0 0.0
      %875 = vmatpush1.msra.mxu0 0.0
      %876 = vmatprep.subr.mxu0 0.0
      %877 = vmatpush1.msra.mxu0 0.0
      %878 = vmatprep.subr.mxu0 0.0
      %879 = vmatpush1.msra.mxu0 0.0
      %880 = vmatprep.mubr.f32.mxu0 0.0
      %881 = vmatmul.mubr.f32.gmra.mrb[0].mxu0 %v800
      %v882 = vpop.f32.mrb[0].mxu0
      %v883 = vadd.f32 0.0, %v882
      %v884 = vpop.f32.mrb[0].mxu0
      %885 = vmatprep.mubr.f32.mxu0 0.0
      %886 = vmatmul.mubr.f32.gmra.mrb[0].mxu0 %v801
      %v887 = vpop.f32.mrb[0].mxu0
      %v888 = vadd.f32 0.0, %v887
      %v889 = vpop.f32.mrb[0].mxu0
      %890 = vmatprep.mubr.f32.mxu0 0.0
      %891 = vmatmul.mubr.f32.gmra.mrb[0].mxu0 %v802
      %v892 = vpop.f32.mrb[0].mxu0
      %v893 = vadd.f32 0.0, %v892
      %v894 = vpop.f32.mrb[0].mxu0
      %895 = vmatprep.mubr.f32.mxu0 0.0
      %896 = vmatmul.mubr.f32.gmra.mrb[0].mxu0 %v803
      %v897 = vpop.f32.mrb[0].mxu0
      %v898 = vadd.f32 0.0, %v897
      %v899 = vpop.f32.mrb[0].mxu0
      %900 = vmatprep.mubr.f32.mxu0 0.0
      %901 = vmatmul.mubr.f32.gmra.mrb[0].mxu0 %v804
      %v902 = vpop.f32.mrb[0].mxu0
      %v903 = vadd.f32 0.0, %v902
      %v904 = vpop.f32.mrb[0].mxu0
      %905 = vmatprep.mubr.f32.mxu0 0.0
      %906 = vmatmul.mubr.f32.gmra.mrb[0].mxu0 %v805
      %v907 = vpop.f32.mrb[0].mxu0
      %v908 = vadd.f32 0.0, %v907
      %v909 = vpop.f32.mrb[0].mxu0
      %910 = vmatprep.mubr.f32.mxu0 0.0
      %911 = vmatmul.mubr.f32.gmra.mrb[0].mxu0 %v806
      %v912 = vpop.f32.mrb[0].mxu0
      %v913 = vadd.f32 0.0, %v912
      %v914 = vpop.f32.mrb[0].mxu0
      %915 = vmatprep.mubr.f32.mxu0 0.0
      %916 = vmatmul.mubr.f32.gmra.mrb[0].mxu0 %v807
      %v917 = vpop.f32.mrb[0].mxu0
      %v918 = vadd.f32 0.0, %v917
      %v919 = vpop.f32.mrb[0].mxu0
      %920 = vmatprep.mubr.f32.mxu0 0.0
      %921 = vmatmul.mubr.f32.gmra.mrb[0].mxu0 %v808
      %v922 = vpop.f32.mrb[0].mxu0
      %v923 = vadd.f32 0.0, %v922
      %v924 = vpop.f32.mrb[0].mxu0
      %925 = vmatprep.mubr.f32.mxu0 0.0
      %926 = vmatmul.mubr.f32.gmra.mrb[0].mxu0 %v809
      %v927 = vpop.f32.mrb[0].mxu0
      %v928 = vadd.f32 0.0, %v927
      %v929 = vpop.f32.mrb[0].mxu0
      %930 = vmatprep.mubr.f32.mxu0 0.0
      %931 = vmatmul.mubr.f32.gmra.mrb[0].mxu0 %v810
      %v932 = vpop.f32.mrb[0].mxu0
      %v933 = vadd.f32 0.0, %v932
      %v934 = vpop.f32.mrb[0].mxu0
      %935 = vmatprep.mubr.f32.mxu0 0.0
      %936 = vmatmul.mubr.f32.gmra.mrb[0].mxu0 %v811
      %v937 = vpop.f32.mrb[0].mxu0
      %v938 = vadd.f32 0.0, %v937
      %v939 = vpop.f32.mrb[0].mxu0
      %940 = vmatprep.mubr.f32.mxu0 0.0
      %941 = vmatmul.mubr.f32.gmra.mrb[0].mxu0 %v812
      %v942 = vpop.f32.mrb[0].mxu0
      %v943 = vadd.f32 0.0, %v942
      %v944 = vpop.f32.mrb[0].mxu0
      %945 = vmatprep.mubr.f32.mxu0 0.0
      %946 = vmatmul.mubr.f32.gmra.mrb[0].mxu0 %v813
      %v947 = vpop.f32.mrb[0].mxu0
      %v948 = vadd.f32 0.0, %v947
      %v949 = vpop.f32.mrb[0].mxu0
      %950 = vmatprep.mubr.f32.mxu0 0.0
      %951 = vmatmul.mubr.f32.gmra.mrb[0].mxu0 %v814
      %v952 = vpop.f32.mrb[0].mxu0
      %v953 = vadd.f32 0.0, %v952
      %v954 = vpop.f32.mrb[0].mxu0
      %955 = vmatprep.mubr.f32.mxu0 0.0
      %956 = vmatmul.mubr.f32.gmra.mrb[0].mxu0 %v815
      %v957 = vpop.f32.mrb[0].mxu0
      %v958 = vadd.f32 0.0, %v957
      %v959 = vpop.f32.mrb[0].mxu0
      %960 = vdwg.mxu0
      %v961 = vadd.f32 %v768, %v883
      %v962 = vadd.f32 %v769, %v888
      %v963 = vadd.f32 %v770, %v893
      %v964 = vadd.f32 %v771, %v898
      %v965 = vadd.f32 %v772, %v903
      %v966 = vadd.f32 %v773, %v908
      %v967 = vadd.f32 %v774, %v913
      %v968 = vadd.f32 %v775, %v918
      %v969 = vadd.f32 %v776, %v923
      %v970 = vadd.f32 %v777, %v928
      %v971 = vadd.f32 %v778, %v933
      %v972 = vadd.f32 %v779, %v938
      %v973 = vadd.f32 %v780, %v943
      %v974 = vadd.f32 %v781, %v948
      %v975 = vadd.f32 %v782, %v953
      %v976 = vadd.f32 %v783, %v958
      %977 = vst [vmem:[#allocation2] sm:$0xff] %v961
      %978 = vst [vmem:[#allocation2 + $0x8] sm:$0xff] %v962
      %979 = vst [vmem:[#allocation2 + $0x10] sm:$0xff] %v963
      %980 = vst [vmem:[#allocation2 + $0x18] sm:$0xff] %v964
      %981 = vst [vmem:[#allocation2 + $0x20] sm:$0xff] %v965
      %982 = vst [vmem:[#allocation2 + $0x28] sm:$0xff] %v966
      %983 = vst [vmem:[#allocation2 + $0x30] sm:$0xff] %v967
      %984 = vst [vmem:[#allocation2 + $0x38] sm:$0xff] %v968
      %985 = vst [vmem:[#allocation2 + $0x40] sm:$0xff] %v969
      %986 = vst [vmem:[#allocation2 + $0x48] sm:$0xff] %v970
      %987 = vst [vmem:[#allocation2 + $0x50] sm:$0xff] %v971
      %988 = vst [vmem:[#allocation2 + $0x58] sm:$0xff] %v972
      %989 = vst [vmem:[#allocation2 + $0x60] sm:$0xff] %v973
      %990 = vst [vmem:[#allocation2 + $0x68] sm:$0xff] %v974
      %991 = vst [vmem:[#allocation2 + $0x70] sm:$0xff] %v975
      %992 = vst [vmem:[#allocation2 + $0x78] sm:$0xff] %v976
    $region57: #{tpu_custom_call.1} parent=1 // pred_fallthru
      _
    // Predicated region
    $region58: #{tpu_custom_call.1} parent=1 // pred_check
      %p993 = pneg %p120
    $region59: #{tpu_custom_call.1} parent=1 // pred_check_branch
      %995 = sbr.rel (%p993) target = $region61
    $region60: #{tpu_custom_call.1} parent=1 // pred_region
      %v996 = vld [vmem:[#allocation2] sm:$0xff]
      %v997 = vld [vmem:[#allocation2 + $0x8] sm:$0xff]
      %v998 = vld [vmem:[#allocation2 + $0x10] sm:$0xff]
      %v999 = vld [vmem:[#allocation2 + $0x18] sm:$0xff]
      %v1000 = vld [vmem:[#allocation2 + $0x20] sm:$0xff]
      %v1001 = vld [vmem:[#allocation2 + $0x28] sm:$0xff]
      %v1002 = vld [vmem:[#allocation2 + $0x30] sm:$0xff]
      %v1003 = vld [vmem:[#allocation2 + $0x38] sm:$0xff]
      %v1004 = vld [vmem:[#allocation2 + $0x40] sm:$0xff]
      %v1005 = vld [vmem:[#allocation2 + $0x48] sm:$0xff]
      %v1006 = vld [vmem:[#allocation2 + $0x50] sm:$0xff]
      %v1007 = vld [vmem:[#allocation2 + $0x58] sm:$0xff]
      %v1008 = vld [vmem:[#allocation2 + $0x60] sm:$0xff]
      %v1009 = vld [vmem:[#allocation2 + $0x68] sm:$0xff]
      %v1010 = vld [vmem:[#allocation2 + $0x70] sm:$0xff]
      %v1011 = vld [vmem:[#allocation2 + $0x78] sm:$0xff]
      %1012 = vst [vmem:[#allocation15] sm:$0xff] %v996
      %1013 = vst [vmem:[#allocation15 + $0x8] sm:$0xff] %v997
      %1014 = vst [vmem:[#allocation15 + $0x10] sm:$0xff] %v998
      %1015 = vst [vmem:[#allocation15 + $0x18] sm:$0xff] %v999
      %1016 = vst [vmem:[#allocation15 + $0x20] sm:$0xff] %v1000
      %1017 = vst [vmem:[#allocation15 + $0x28] sm:$0xff] %v1001
      %1018 = vst [vmem:[#allocation15 + $0x30] sm:$0xff] %v1002
      %1019 = vst [vmem:[#allocation15 + $0x38] sm:$0xff] %v1003
      %1020 = vst [vmem:[#allocation15 + $0x40] sm:$0xff] %v1004
      %1021 = vst [vmem:[#allocation15 + $0x48] sm:$0xff] %v1005
      %1022 = vst [vmem:[#allocation15 + $0x50] sm:$0xff] %v1006
      %1023 = vst [vmem:[#allocation15 + $0x58] sm:$0xff] %v1007
      %1024 = vst [vmem:[#allocation15 + $0x60] sm:$0xff] %v1008
      %1025 = vst [vmem:[#allocation15 + $0x68] sm:$0xff] %v1009
      %1026 = vst [vmem:[#allocation15 + $0x70] sm:$0xff] %v1010
      %1027 = vst [vmem:[#allocation15 + $0x78] sm:$0xff] %v1011
    $region61: #{tpu_custom_call.1} parent=1 // pred_fallthru
      _
    // Predicated region
    $region62: #{tpu_custom_call.1} parent=1 // pred_check
      _
    $region63: #{tpu_custom_call.1} parent=1 // pred_check_branch
      %1029 = sbr.rel (0) target = $region65
    $region64: #{tpu_custom_call.1} parent=1 // pred_region
      %s1031 = ssub.s32 2048, 2048
      %1032 = vsyncadd [#allocation8], %s1031
      %s1033 = sshll.u32 [#allocation15], 4
      %s1034 = int_to_ptr.vmem [resolvable:$true] %s1033
      %1039 = dma.vmem_to_hbm [thread:$0]  %s1034, 2048, %s7, [#allocation8], 128, 128, 8
    $region65: #{tpu_custom_call.1} parent=1 // pred_fallthru
      _
    // Predicated region
    $region66: #{tpu_custom_call.1} parent=1 // pred_check
      _
    $region67: #{tpu_custom_call.1} parent=1 // pred_check_branch
      %1041 = sbr.rel (0) target = $region69
    $region68: #{tpu_custom_call.1} parent=1 // pred_region
      %s1043 = ssub.s32 2048, 2048
      %1044 = vsyncadd [#allocation17], %s1043
      %s1045 = sshll.u32 [#allocation16], 4
      %s1046 = int_to_ptr.vmem [resolvable:$true] %s1045
      %1051 = dma.vmem_to_hbm [thread:$0]  %s1046, 2048, %s8, [#allocation17], 128, 128, 8
    $region69: #{tpu_custom_call.1} parent=1 // pred_fallthru
      _
    // Predicated region
    $region70: #{tpu_custom_call.1} parent=1 // pred_check
      _
    $region71: #{tpu_custom_call.1} parent=1 // pred_check_branch
      %1053 = sbr.rel (0) target = $region73
    $region72: #{tpu_custom_call.1} parent=1 // pred_region
      %1054 = dma.done [#allocation8], 2048
    $region73: #{tpu_custom_call.1} parent=1 // pred_fallthru
      _
    // Predicated region
    $region74: #{tpu_custom_call.1} parent=1 // pred_check
      _
    $region75: #{tpu_custom_call.1} parent=1 // pred_check_branch
      %1056 = sbr.rel (0) target = $region77
    $region76: #{tpu_custom_call.1} parent=1 // pred_region
      %1057 = dma.done [#allocation17], 2048
    $region77: #{tpu_custom_call.1} parent=1 // pred_fallthru
      _
    %1058 = vsyncpa [#allocation7], 1
    %1059 = vsyncpa [#allocation10], 1
    %1060 = vsyncpa [#allocation13], 1
    %1061 = vsyncpa [#allocation8], 1
    %1062 = vsyncpa [#allocation17], 1

</llo_original>
